<compile_context>
chip_gen: v5e
topology: v5e:2x2
jax: 0.10.0
libtpu: 0.0.40
codegen_flags: <defaults>
</compile_context>

<pallas_src>
import functools
import math

import jax
import jax.numpy as jnp
from jax import lax
from jax.experimental import pallas as pl
from jax.experimental.pallas import tpu as pltpu

d_k = d_v = D_K = D_V = 64  # module constants (scale uses d_k = 64, as in the PyTorch spec)


# --------------------------------------------------------------------------- #
# Kernel
# --------------------------------------------------------------------------- #
def _sdpa_flash_kernel(q_ref, k_ref, v_ref, m_ref, o_ref, m_sc, l_sc, acc_sc,
                       *, use_bf16):
    """One (G heads, Tq queries) x (Tk keys) step of online-softmax attention.

    q_ref: (G, Tq, D)   k_ref / v_ref: (G, Tk, D)
    m_ref: (G, Tq, Tk) or (G, 1, Tk) int8 (nonzero = masked)
    o_ref: (G, Tq, D)
    m_sc / l_sc: (G, Tq, 1) f32   acc_sc: (G, Tq, D) f32
    """
    kstep = pl.program_id(2)

    @pl.when(kstep == 0)
    def _():
        m_sc[...] = jnp.full_like(m_sc, -jnp.inf)
        l_sc[...] = jnp.zeros_like(l_sc)
        acc_sc[...] = jnp.zeros_like(acc_sc)

    mm_dtype = jnp.bfloat16 if use_bf16 else jnp.float32

    # Fold 1/sqrt(d_k) into Q (Tq*D muls instead of Tq*Tk).
    scale = jnp.asarray(1.0 / math.sqrt(D_K), dtype=jnp.float32)
    q = (q_ref[...].astype(jnp.float32) * scale).astype(mm_dtype)
    k = k_ref[...].astype(mm_dtype)

    # scores = Q @ K^T : contract the last dims directly (no XLU transpose of K).
    s = lax.dot_general(q, k, (((2,), (2,)), ((0,), (0,))),
                        preferred_element_type=jnp.float32)       # (G, Tq, Tk) f32

    # masked_fill_(attn_mask, -1e9); m_ref broadcasts over Tq on the key-padding path.
    s = jnp.where(m_ref[...] != 0, jnp.float32(-1.0e9), s)

    # Online (flash) softmax update.
    m_prev = m_sc[...]
    m_new = jnp.maximum(m_prev, jnp.max(s, axis=-1, keepdims=True))
    alpha = jnp.exp(m_prev - m_new)
    p = jnp.exp(s - m_new)                                        # (G, Tq, Tk) f32
    l_sc[...] = alpha * l_sc[...] + jnp.sum(p, axis=-1, keepdims=True)

    v = v_ref[...].astype(mm_dtype)
    acc_sc[...] = alpha * acc_sc[...] + lax.dot_general(
        p.astype(mm_dtype), v, (((2,), (1,)), ((0,), (0,))),
        preferred_element_type=jnp.float32)                       # (G, Tq, D) f32
    m_sc[...] = m_new

    @pl.when(kstep == pl.num_programs(2) - 1)
    def _():
        denom = l_sc[...]
        r = pl.reciprocal(denom, approx=True)   # EUP vrcp (free slot)
        r = r * (2.0 - denom * r)               # one Newton step -> ~f32 accuracy
        o_ref[...] = (acc_sc[...] * r).astype(o_ref.dtype)


# --------------------------------------------------------------------------- #
# Tile selection (generation-aware)
# --------------------------------------------------------------------------- #
def _vmem_capacity_bytes():
    try:
        cap = getattr(pltpu.get_tpu_info(), "vmem_capacity_bytes", None)
        if cap:
            return int(cap)
    except Exception:
        pass
    return 64 * 1024 * 1024  # conservative default (v7x per-TC VMEM)


def _largest_divisor(n, limit, mult):
    """Largest divisor of n that is <= limit and a multiple of `mult` (or None)."""
    t = (limit // mult) * mult
    while t >= mult:
        if n % t == 0:
            return t
        t -= mult
    return None


def _pick_tiles(BH, S, D, itemsize, mask_key_padding, budget_bytes):
    """Choose (G heads/step, Tq query rows/step, Tk key cols/step)."""
    # Key chunk: multiple of 128 lanes when possible (lane-aligned int8 mask /
    # f32 score tiles); otherwise take the whole key axis.
    tk = _largest_divisor(S, 512, 128) or S
    # Query tile: multiple of 32 sublanes (int8 mask minimum), prefer 256 to
    # keep the 256-wide MXU M-dimension busy; fall back to multiples of 8.
    tq = _largest_divisor(S, 256, 32) or _largest_divisor(S, 256, 8) or S

    def per_slice(tq_, tk_):
        mask_bytes = tk_ if mask_key_padding else tq_ * tk_          # int8
        streamed = (2 * tq_ * D + 2 * tk_ * D) * itemsize + mask_bytes  # Q+out, K+V, mask
        scratch = (2 * tq_ + tq_ * D) * 4                             # m, l, acc (f32)
        temps = 3 * tq_ * tk_ * 4                                     # scores / p / where
        return 2 * streamed + scratch + temps                         # x2: double buffering

    # Shrink the query tile before ever exceeding the budget silently.
    while per_slice(tq, tk) > budget_bytes and tq > 8:
        smaller = (_largest_divisor(S, max(tq // 2, 8), 32)
                   or _largest_divisor(S, max(tq // 2, 8), 8))
        if smaller is None or smaller >= tq:
            break
        tq = smaller

    # Largest divisor of BH that fits; keep >= 2 steps on the leading
    # ("parallel") axis so both v7x TensorCores get work.
    g_cap = BH if BH < 2 else max(1, BH // 2)
    g = 1
    for cand in range(1, BH + 1):
        if BH % cand == 0 and cand <= g_cap and cand * per_slice(tq, tk) <= budget_bytes:
            g = cand
    return g, tq, tk


# --------------------------------------------------------------------------- #
# Wrapper
# --------------------------------------------------------------------------- #
def _canonicalize_mask(attn_mask, B, H, S):
    """Return (int8 mask, key_padding flag) as (BH, 1, S) or (BH, S, S)."""
    m = jnp.asarray(attn_mask)
    if m.ndim == 2:                       # (B, S): key-padding
        m = m[:, None, None, :]
    elif m.ndim == 3:                     # (B, H, S): key-padding
        m = m[:, :, None, :]
    qdim = m.shape[-2]
    m = jnp.broadcast_to(m, (B, H, qdim, S)).astype(jnp.int8)
    if qdim == 1:
        return m.reshape(B * H, 1, S), True          # O(S) bytes per head
    m = jnp.broadcast_to(m, (B, H, S, S))
    return m.reshape(B * H, S, S), False             # general O(S^2) mask


def scaled_dot_product_attention(Q, K, V, attn_mask, *, use_bf16=False):
    """Q, K, V: (B, H, S, D); attn_mask broadcastable to (B, H, S, S), True = masked.

    Returns context of shape (B, H, S, D), matching the PyTorch module.
    """
    B, H, S, D = Q.shape
    BH = B * H

    q = Q.reshape(BH, S, D)
    k = K.reshape(BH, S, D)
    v = V.reshape(BH, S, D)
    mask, key_padding = _canonicalize_mask(attn_mask, B, H, S)

    vmem_cap = _vmem_capacity_bytes()
    budget = vmem_cap // 2                 # pipeline working-set target
    vmem_limit = (vmem_cap * 3) // 4       # headroom for compiler internal scratch

    g, tq, tk = _pick_tiles(BH, S, D, q.dtype.itemsize, key_padding, budget)
    grid = (BH // g, S // tq, S // tk)     # key axis last: Q / out / scratch stay resident

    if key_padding:
        mask_spec = pl.BlockSpec((g, 1, tk), lambda i, j, kk: (i, 0, kk))
    else:
        mask_spec = pl.BlockSpec((g, tq, tk), lambda i, j, kk: (i, j, kk))

    kernel = functools.partial(_sdpa_flash_kernel, use_bf16=use_bf16)

    out = pl.pallas_call(
        kernel,
        out_shape=jax.ShapeDtypeStruct((BH, S, D), Q.dtype),
        grid_spec=pltpu.PrefetchScalarGridSpec(
            num_scalar_prefetch=0,
            grid=grid,
            in_specs=[
                pl.BlockSpec((g, tq, D), lambda i, j, kk: (i, j, 0)),   # Q tile (resident over kk)
                pl.BlockSpec((g, tk, D), lambda i, j, kk: (i, kk, 0)),  # K chunk
                pl.BlockSpec((g, tk, D), lambda i, j, kk: (i, kk, 0)),  # V chunk
                mask_spec,                                              # int8 mask
            ],
            out_specs=pl.BlockSpec((g, tq, D), lambda i, j, kk: (i, j, 0)),
            scratch_shapes=[
                pltpu.VMEM((g, tq, 1), jnp.float32),   # running max
                pltpu.VMEM((g, tq, 1), jnp.float32),   # running denominator
                pltpu.VMEM((g, tq, D), jnp.float32),   # running context accumulator
            ],
        ),
        compiler_params=pltpu.CompilerParams(
            dimension_semantics=("parallel", "parallel", "arbitrary"),
            vmem_limit_bytes=vmem_limit,
        ),
    )(q, k, v, mask)

    return out.reshape(B, H, S, D)


# --------------------------------------------------------------------------- #
# Reference + driver
# --------------------------------------------------------------------------- #
def _reference(Q, K, V, attn_mask):
    scale = 1.0 / math.sqrt(D_K)
    scores = jnp.einsum("bhqd,bhkd->bhqk", Q, K).astype(jnp.float32) * scale
    scores = jnp.where(attn_mask, jnp.float32(-1.0e9), scores)
    attn = jax.nn.softmax(scores, axis=-1)
    return jnp.einsum("bhqk,bhkd->bhqd", attn, V.astype(jnp.float32)).astype(Q.dtype)


if __name__ == "__main__":
    key = jax.random.PRNGKey(0)
    kq, kk_, kv = jax.random.split(key, 3)

    B, H, S = 2, 4, 8
    Q = jax.random.normal(kq, (B, H, S, D_K), dtype=jnp.float32)
    K = jax.random.normal(kk_, (B, H, S, D_K), dtype=jnp.float32)
    V = jax.random.normal(kv, (B, H, S, D_V), dtype=jnp.float32)

    # Pad-style mask on the last 2 key positions (True = masked).
    key_pad = jnp.arange(S) >= (S - 2)                                   # (S,)
    full_mask = jnp.broadcast_to(key_pad[None, None, None, :], (B, H, S, S))

    ref = _reference(Q, K, V, full_mask)

    # General (B, H, S, S) mask path.
    out_full = jax.block_until_ready(scaled_dot_product_attention(Q, K, V, full_mask))
    assert out_full.shape == (B, H, S, D_V)
    assert jnp.allclose(out_full, ref, atol=1e-5, rtol=1e-5), "general-mask path mismatch"

    # Compact key-padding mask path ((B, H, 1, S) -> no O(S^2) mask stream).
    kp_mask = jnp.broadcast_to(key_pad[None, None, None, :], (B, H, 1, S))
    out_kp = jax.block_until_ready(scaled_dot_product_attention(Q, K, V, kp_mask))
    assert jnp.allclose(out_kp, ref, atol=1e-5, rtol=1e-5), "key-padding path mismatch"

    print("KERNEL_OK")
</pallas_src>

<mosaic_0001>
module attributes {stable_mosaic.version = 11 : i64} {
  func.func @_sdpa_flash_kernel(%arg0: i32, %arg1: i32, %arg2: i32, %arg3: memref<4x8x64xf32, #tpu.memory_space<vmem>>, %arg4: memref<4x8x64xf32, #tpu.memory_space<vmem>>, %arg5: memref<4x8x64xf32, #tpu.memory_space<vmem>>, %arg6: memref<4x8x8xi8, #tpu.memory_space<vmem>>, %arg7: memref<4x8x64xf32, #tpu.memory_space<vmem>>, %arg8: memref<4x8x1xf32, #tpu.memory_space<vmem>>, %arg9: memref<4x8x1xf32, #tpu.memory_space<vmem>>, %arg10: memref<4x8x64xf32, #tpu.memory_space<vmem>>) attributes {dimension_semantics = [#tpu.dimension_semantics<parallel>, #tpu.dimension_semantics<parallel>, #tpu.dimension_semantics<arbitrary>], iteration_bounds = array<i64: 2, 1, 1>, scalar_prefetch = 0 : i64, scratch_operands = 3 : i64, tpu.core_type = #tpu.core_type<tc>, window_params = [{transform_indices = @transform_0, window_bounds = array<i64: 4, 8, 64>}, {transform_indices = @transform_1, window_bounds = array<i64: 4, 8, 64>}, {transform_indices = @transform_2, window_bounds = array<i64: 4, 8, 64>}, {transform_indices = @transform_3, window_bounds = array<i64: 4, 8, 8>}, {transform_indices = @transform_4, window_bounds = array<i64: 4, 8, 64>}]} {
    %c0_i32 = arith.constant 0 : i32
    %0 = arith.cmpi eq, %arg2, %c0_i32 : i32
    %1 = arith.extui %0 : i1 to i32
    %c0_i32_0 = arith.constant 0 : i32
    %2 = arith.cmpi ne, %1, %c0_i32_0 : i32
    scf.if %2 {
      %cst_37 = arith.constant 0xFF800000 : f32
      %39 = vector.broadcast %cst_37 : f32 to vector<4x8x1xf32>
      %c0_38 = arith.constant 0 : index
      %c0_39 = arith.constant 0 : index
      %c0_40 = arith.constant 0 : index
      %40 = vector.load %arg8[%c0_38, %c0_39, %c0_40] : memref<4x8x1xf32, #tpu.memory_space<vmem>>, vector<4x8x1xf32>
      tpu.vector_store %arg8[%c0_38, %c0_39, %c0_40], %39 {strides = array<i32>} : memref<4x8x1xf32, #tpu.memory_space<vmem>>, vector<4x8x1xf32>,
      %cst_41 = arith.constant 0.000000e+00 : f32
      %41 = vector.broadcast %cst_41 : f32 to vector<4x8x1xf32>
      %c0_42 = arith.constant 0 : index
      %c0_43 = arith.constant 0 : index
      %c0_44 = arith.constant 0 : index
      %42 = vector.load %arg9[%c0_42, %c0_43, %c0_44] : memref<4x8x1xf32, #tpu.memory_space<vmem>>, vector<4x8x1xf32>
      tpu.vector_store %arg9[%c0_42, %c0_43, %c0_44], %41 {strides = array<i32>} : memref<4x8x1xf32, #tpu.memory_space<vmem>>, vector<4x8x1xf32>,
      %cst_45 = arith.constant 0.000000e+00 : f32
      %43 = vector.broadcast %cst_45 : f32 to vector<4x8x64xf32>
      %c0_46 = arith.constant 0 : index
      %c0_47 = arith.constant 0 : index
      %c0_48 = arith.constant 0 : index
      %44 = vector.load %arg10[%c0_46, %c0_47, %c0_48] : memref<4x8x64xf32, #tpu.memory_space<vmem>>, vector<4x8x64xf32>
      tpu.vector_store %arg10[%c0_46, %c0_47, %c0_48], %43 {strides = array<i32>} : memref<4x8x64xf32, #tpu.memory_space<vmem>>, vector<4x8x64xf32>,
    } else {
    }
    %c0 = arith.constant 0 : index
    %c0_1 = arith.constant 0 : index
    %c0_2 = arith.constant 0 : index
    %3 = vector.load %arg3[%c0, %c0_1, %c0_2] : memref<4x8x64xf32, #tpu.memory_space<vmem>>, vector<4x8x64xf32>
    %cst = arith.constant 1.250000e-01 : f32
    %4 = vector.broadcast %cst : f32 to vector<4x8x64xf32>
    %5 = arith.mulf %3, %4 : vector<4x8x64xf32>
    %c0_3 = arith.constant 0 : index
    %c0_4 = arith.constant 0 : index
    %c0_5 = arith.constant 0 : index
    %6 = vector.load %arg4[%c0_3, %c0_4, %c0_5] : memref<4x8x64xf32, #tpu.memory_space<vmem>>, vector<4x8x64xf32>
    %cst_6 = arith.constant dense<0.000000e+00> : vector<4x8x8xf32>
    %7 = tpu.matmul %5, %6, %cst_6 {dimension_numbers = #tpu.dot_dimension_numbers<[2], [2], [1], [1], [0, 0, 0, 1, 1, 1], [0], [0]>} : vector<4x8x64xf32>, vector<4x8x64xf32>, vector<4x8x8xf32> -> vector<4x8x8xf32>
    %c0_7 = arith.constant 0 : index
    %c0_8 = arith.constant 0 : index
    %c0_9 = arith.constant 0 : index
    %8 = vector.load %arg6[%c0_7, %c0_8, %c0_9] : memref<4x8x8xi8, #tpu.memory_space<vmem>>, vector<4x8x8xi8>
    %c0_i8 = arith.constant 0 : i8
    %9 = vector.broadcast %c0_i8 : i8 to vector<4x8x8xi8>
    %10 = arith.cmpi ne, %8, %9 : vector<4x8x8xi8>
    %cst_10 = arith.constant -1.000000e+09 : f32
    %11 = vector.broadcast %cst_10 : f32 to vector<4x8x8xf32>
    %12 = arith.select %10, %11, %7 : vector<4x8x8xi1>, vector<4x8x8xf32>
    %c0_11 = arith.constant 0 : index
    %c0_12 = arith.constant 0 : index
    %c0_13 = arith.constant 0 : index
    %13 = vector.load %arg8[%c0_11, %c0_12, %c0_13] : memref<4x8x1xf32, #tpu.memory_space<vmem>>, vector<4x8x1xf32>
    %cst_14 = arith.constant dense<0xFF800000> : vector<4x8xf32>
    %14 = vector.multi_reduction <maximumf>, %12, %cst_14 [2] : vector<4x8x8xf32> to vector<4x8xf32>
    %15 = vector.shape_cast %14 : vector<4x8xf32> to vector<4x8x1xf32>
    %16 = arith.maximumf %13, %15 : vector<4x8x1xf32>
    %17 = arith.subf %13, %16 : vector<4x8x1xf32>
    %18 = math.exp %17 : vector<4x8x1xf32>
    %19 = vector.broadcast %16 : vector<4x8x1xf32> to vector<4x8x8xf32>
    %20 = arith.subf %12, %19 : vector<4x8x8xf32>
    %21 = math.exp %20 : vector<4x8x8xf32>
    %c0_15 = arith.constant 0 : index
    %c0_16 = arith.constant 0 : index
    %c0_17 = arith.constant 0 : index
    %22 = vector.load %arg9[%c0_15, %c0_16, %c0_17] : memref<4x8x1xf32, #tpu.memory_space<vmem>>, vector<4x8x1xf32>
    %23 = arith.mulf %18, %22 : vector<4x8x1xf32>
    %cst_18 = arith.constant dense<0.000000e+00> : vector<4x8xf32>
    %24 = vector.multi_reduction <add>, %21, %cst_18 [2] : vector<4x8x8xf32> to vector<4x8xf32>
    %25 = vector.shape_cast %24 : vector<4x8xf32> to vector<4x8x1xf32>
    %26 = arith.addf %23, %25 : vector<4x8x1xf32>
    %c0_19 = arith.constant 0 : index
    %c0_20 = arith.constant 0 : index
    %c0_21 = arith.constant 0 : index
    %27 = vector.load %arg9[%c0_19, %c0_20, %c0_21] : memref<4x8x1xf32, #tpu.memory_space<vmem>>, vector<4x8x1xf32>
    tpu.vector_store %arg9[%c0_19, %c0_20, %c0_21], %26 {strides = array<i32>} : memref<4x8x1xf32, #tpu.memory_space<vmem>>, vector<4x8x1xf32>,
    %c0_22 = arith.constant 0 : index
    %c0_23 = arith.constant 0 : index
    %c0_24 = arith.constant 0 : index
    %28 = vector.load %arg5[%c0_22, %c0_23, %c0_24] : memref<4x8x64xf32, #tpu.memory_space<vmem>>, vector<4x8x64xf32>
    %c0_25 = arith.constant 0 : index
    %c0_26 = arith.constant 0 : index
    %c0_27 = arith.constant 0 : index
    %29 = vector.load %arg10[%c0_25, %c0_26, %c0_27] : memref<4x8x64xf32, #tpu.memory_space<vmem>>, vector<4x8x64xf32>
    %30 = vector.broadcast %18 : vector<4x8x1xf32> to vector<4x8x64xf32>
    %31 = arith.mulf %30, %29 : vector<4x8x64xf32>
    %cst_28 = arith.constant dense<0.000000e+00> : vector<4x8x64xf32>
    %32 = tpu.matmul %21, %28, %cst_28 {dimension_numbers = #tpu.dot_dimension_numbers<[2], [1], [1], [2], [0, 0, 0, 1, 1, 2], [0], [0]>} : vector<4x8x8xf32>, vector<4x8x64xf32>, vector<4x8x64xf32> -> vector<4x8x64xf32>
    %33 = arith.addf %31, %32 : vector<4x8x64xf32>
    %c0_29 = arith.constant 0 : index
    %c0_30 = arith.constant 0 : index
    %c0_31 = arith.constant 0 : index
    %34 = vector.load %arg10[%c0_29, %c0_30, %c0_31] : memref<4x8x64xf32, #tpu.memory_space<vmem>>, vector<4x8x64xf32>
    tpu.vector_store %arg10[%c0_29, %c0_30, %c0_31], %33 {strides = array<i32>} : memref<4x8x64xf32, #tpu.memory_space<vmem>>, vector<4x8x64xf32>,
    %c0_32 = arith.constant 0 : index
    %c0_33 = arith.constant 0 : index
    %c0_34 = arith.constant 0 : index
    %35 = vector.load %arg8[%c0_32, %c0_33, %c0_34] : memref<4x8x1xf32, #tpu.memory_space<vmem>>, vector<4x8x1xf32>
    tpu.vector_store %arg8[%c0_32, %c0_33, %c0_34], %16 {strides = array<i32>} : memref<4x8x1xf32, #tpu.memory_space<vmem>>, vector<4x8x1xf32>,
    %c0_i32_35 = arith.constant 0 : i32
    %36 = arith.cmpi eq, %arg2, %c0_i32_35 : i32
    %37 = arith.extui %36 : i1 to i32
    %c0_i32_36 = arith.constant 0 : i32
    %38 = arith.cmpi ne, %37, %c0_i32_36 : i32
    scf.if %38 {
      %c0_37 = arith.constant 0 : index
      %c0_38 = arith.constant 0 : index
      %c0_39 = arith.constant 0 : index
      %39 = vector.load %arg9[%c0_37, %c0_38, %c0_39] : memref<4x8x1xf32, #tpu.memory_space<vmem>>, vector<4x8x1xf32>
      %40 = tpu.reciprocal %39 {approx = true} : vector<4x8x1xf32> -> vector<4x8x1xf32>
      %41 = arith.mulf %39, %40 : vector<4x8x1xf32>
      %cst_40 = arith.constant 2.000000e+00 : f32
      %42 = vector.broadcast %cst_40 : f32 to vector<4x8x1xf32>
      %43 = arith.subf %42, %41 : vector<4x8x1xf32>
      %44 = arith.mulf %40, %43 : vector<4x8x1xf32>
      %c0_41 = arith.constant 0 : index
      %c0_42 = arith.constant 0 : index
      %c0_43 = arith.constant 0 : index
      %45 = vector.load %arg10[%c0_41, %c0_42, %c0_43] : memref<4x8x64xf32, #tpu.memory_space<vmem>>, vector<4x8x64xf32>
      %46 = vector.broadcast %44 : vector<4x8x1xf32> to vector<4x8x64xf32>
      %47 = arith.mulf %45, %46 : vector<4x8x64xf32>
      %c0_44 = arith.constant 0 : index
      %c0_45 = arith.constant 0 : index
      %c0_46 = arith.constant 0 : index
      %48 = vector.load %arg7[%c0_44, %c0_45, %c0_46] : memref<4x8x64xf32, #tpu.memory_space<vmem>>, vector<4x8x64xf32>
      tpu.vector_store %arg7[%c0_44, %c0_45, %c0_46], %47 {strides = array<i32>} : memref<4x8x64xf32, #tpu.memory_space<vmem>>, vector<4x8x64xf32>,
    } else {
    }
    return
  }
  func.func @transform_0(%arg0: i32, %arg1: i32, %arg2: i32) -> (i32, i32, i32) {
    %c0_i32 = arith.constant 0 : i32
    %c0_i32_0 = arith.constant 0 : i32
    return %arg0, %arg1, %c0_i32 : i32, i32, i32
  }
  func.func @transform_1(%arg0: i32, %arg1: i32, %arg2: i32) -> (i32, i32, i32) {
    %c0_i32 = arith.constant 0 : i32
    %c0_i32_0 = arith.constant 0 : i32
    return %arg0, %arg2, %c0_i32 : i32, i32, i32
  }
  func.func @transform_2(%arg0: i32, %arg1: i32, %arg2: i32) -> (i32, i32, i32) {
    %c0_i32 = arith.constant 0 : i32
    %c0_i32_0 = arith.constant 0 : i32
    return %arg0, %arg2, %c0_i32 : i32, i32, i32
  }
  func.func @transform_3(%arg0: i32, %arg1: i32, %arg2: i32) -> (i32, i32, i32) {
    %c0_i32 = arith.constant 0 : i32
    return %arg0, %arg1, %arg2 : i32, i32, i32
  }
  func.func @transform_4(%arg0: i32, %arg1: i32, %arg2: i32) -> (i32, i32, i32) {
    %c0_i32 = arith.constant 0 : i32
    %c0_i32_0 = arith.constant 0 : i32
    return %arg0, %arg1, %c0_i32 : i32, i32, i32
  }
}

</mosaic_0001>

<llo_original>
// kernel: tpu_custom_call.1
$region0: #{tpu_custom_call.1}
  #allocation0 [shape = 'u32[]', space=smem, size = 0x4, offset = 0x4, fixed_abs, tag = 'smem constant byte address 0x4 - core index']
  #allocation1 [shape = 'u32[72,128]{1,0:T(1,128)}', space=vmem, size = 0x9000, scoped, tag = 'internal scratch']
  #allocation2 [shape = 'f32[4,8,1]{2,1,0:T(8,128)}', space=vmem, size = 0x4000, scoped, tag = 'scratch operand']
  #allocation3 [shape = 'f32[4,8,1]{2,1,0:T(8,128)}', space=vmem, size = 0x4000, scoped, tag = 'scratch operand']
  #allocation4 [shape = 'f32[4,8,64]{2,1,0:T(8,128)}', space=vmem, size = 0x4000, scoped, tag = 'scratch operand']
  %s0 = inlined_call_operand.hbm [shape: f32[8,8,64], index: 0, kind: input, shape index: {}]
  %s1 = inlined_call_operand.hbm [shape: f32[8,8,64], index: 1, kind: input, shape index: {}]
  %s2 = inlined_call_operand.hbm [shape: f32[8,8,64], index: 2, kind: input, shape index: {}]
  %s3 = inlined_call_operand.hbm [shape: s8[8,8,8], index: 3, kind: input, shape index: {}]
  %s4 = inlined_call_operand.hbm [shape: f32[8,8,64], index: 4, kind: output, shape index: {}]
  %s5 = sld [smem:[#allocation0]]
  $region73: #{tpu_custom_call.1} parent=0
    _
  %s7 = ssub.s32 1, %s5
  %s8 = scalar_select 0, %s7, %s5
  $region1: #{tpu_custom_call.1} parent=0
    #allocation5 [shape = 'u8[32768]{0}', space=vmem, size = 0x8000, scoped, tag = 'input window, operand 0']
    #allocation6 [shape = 's32[2]{0}', space=sflag, size = 0x8, scoped, tag = 'scoped memory for tpu_custom_call.1']
    #allocation7 [shape = 's32[2]{0}', space=sflag, size = 0x8, scoped, tag = 'scoped memory for tpu_custom_call.1']
    #allocation8 [shape = 'u8[32768]{0}', space=vmem, size = 0x8000, scoped, tag = 'input window, operand 1']
    #allocation9 [shape = 's32[2]{0}', space=sflag, size = 0x8, scoped, tag = 'scoped memory for tpu_custom_call.1']
    #allocation10 [shape = 'u8[32768]{0}', space=vmem, size = 0x8000, scoped, tag = 'input window, operand 2']
    #allocation11 [shape = 'u8[8192]{0}', space=vmem, size = 0x2000, scoped, tag = 'input window, operand 3']
    #allocation12 [shape = 's32[2]{0}', space=sflag, size = 0x8, scoped, tag = 'scoped memory for tpu_custom_call.1']
    #allocation13 [shape = 'u8[32768]{0}', space=vmem, size = 0x8000, scoped, tag = 'output window, operand 0']
    %9 = vsyncpa [#allocation6], 0
    %s10 = scalar_lea.sflag [#allocation6], 1
    %11 = vsyncpa %s10, 0
    %12 = vsyncpa [#allocation9], 0
    %s13 = scalar_lea.sflag [#allocation9], 1
    %14 = vsyncpa %s13, 0
    %15 = vsyncpa [#allocation12], 0
    %s16 = scalar_lea.sflag [#allocation12], 1
    %17 = vsyncpa %s16, 0
    %18 = vsyncpa [#allocation7], 0
    %s19 = scalar_lea.sflag [#allocation7], 1
    %20 = vsyncpa %s19, 0
    loop: start=0, step=1, limit=4
    $region2: #{tpu_custom_call.1} parent=1 // loop_pre_header
      _
    $region3: #{tpu_custom_call.1} parent=1 // loop_header
      %s22 = sphi 0, %s26
      %p23 = scmp.ge.s32.totalorder %s22, 4
      %s29 = sphi 0, %s48
      %s30 = sphi 0, %s44
      %s31 = sphi 0, %s40
      %s32 = sphi 0, %s29
      %s33 = sphi 0, %s30
      %s34 = sphi 0, %s31
      %s35 = sphi 0, %s32
      %s36 = sphi 0, %s33
      %s37 = sphi 0, %s34
      %s53 = sphi 0, %s55
      %s56 = sphi 0, %s53
      %s57 = sphi 0, %s56
      %s73 = sphi 0, %s57
      %s81 = sphi 0, %s83
      %s84 = sphi 0, %s81
      %s85 = sphi 0, %s84
      %s101 = sphi 0, %s85
      %s109 = sphi 0, %s111
      %s112 = sphi 0, %s109
      %s113 = sphi 0, %s112
      %s129 = sphi 0, %s113
      %s139 = sphi 0, %s141
      %s142 = sphi 0, %s139
      %s143 = sphi 0, %s142
      %s159 = sphi 0, %s143
      %s167 = sphi 0, %s169
      %s170 = sphi 0, %s167
      %s171 = sphi 0, %s170
      %s187 = sphi 0, %s171
    $region4: #{tpu_custom_call.1} parent=1 // loop_header_branch
      %25 = sbr.rel (%p23) target = $region8
    $region5: #{tpu_custom_call.1} parent=1 // loop_body
      %s27 = ssub.s32 %s22, 1
      %s28 = ssub.s32 %s22, 2
      %s38 = sadd.s32 1, %s31
      %p39 = scmp.ge.s32.totalorder %s38, 1
      %s40 = scalar_select %p39, 0, %s38
      %s41 = sadd.s32 1, %s30
      %s42 = scalar_select %p39, %s41, %s30
      %p43 = scmp.ge.s32.totalorder %s42, 1
      %s44 = scalar_select %p43, 0, %s42
      %s45 = sadd.s32 1, %s29
      %s46 = scalar_select %p43, %s45, %s29
      %p47 = scmp.ge.s32.totalorder %s46, 2
      %s48 = scalar_select %p47, 0, %s46
      %s49 = ssub.s32 %s29, %s48
      %s50 = ssub.s32 %s30, %s44
      %s51 = sor.u32 %s49, %s50
      %p52 = scmp.eq.s32.totalorder %s51, 0
      %s54 = sadd.s32 %s53, 1
      %s55 = scalar_select %p52, %s53, %s54
      %p58 = pneg %p52
      %p59 = scmp.eq.s32.totalorder %s22, 1
      %p60 = por %p58, %p59
      %p61 = scmp.ne.s32.totalorder %s53, %s56
      %p62 = scmp.eq.s32.totalorder %s22, 0
      %p63 = por %p61, %p62
      %p64 = scmp.ne.s32.totalorder %s53, %s56
      %p65 = scmp.eq.s32.totalorder %s27, 1
      %p66 = por %p64, %p65
      %p67 = scmp.ne.s32.totalorder %s56, %s57
      %p68 = scmp.eq.s32.totalorder %s27, 0
      %p69 = por %p67, %p68
      %p70 = scmp.ne.s32.totalorder %s56, %s57
      %p71 = scmp.eq.s32.totalorder %s28, 1
      %p72 = por %p70, %p71
      %p74 = scmp.ne.s32.totalorder %s57, %s73
      %p75 = scmp.eq.s32.totalorder %s28, 0
      %p76 = por %p74, %p75
      %s77 = ssub.s32 %s29, %s48
      %s78 = ssub.s32 %s31, %s40
      %s79 = sor.u32 %s77, %s78
      %p80 = scmp.eq.s32.totalorder %s79, 0
      %s82 = sadd.s32 %s81, 1
      %s83 = scalar_select %p80, %s81, %s82
      %p86 = pneg %p80
      %p87 = scmp.eq.s32.totalorder %s22, 1
      %p88 = por %p86, %p87
      %p89 = scmp.ne.s32.totalorder %s81, %s84
      %p90 = scmp.eq.s32.totalorder %s22, 0
      %p91 = por %p89, %p90
      %p92 = scmp.ne.s32.totalorder %s81, %s84
      %p93 = scmp.eq.s32.totalorder %s27, 1
      %p94 = por %p92, %p93
      %p95 = scmp.ne.s32.totalorder %s84, %s85
      %p96 = scmp.eq.s32.totalorder %s27, 0
      %p97 = por %p95, %p96
      %p98 = scmp.ne.s32.totalorder %s84, %s85
      %p99 = scmp.eq.s32.totalorder %s28, 1
      %p100 = por %p98, %p99
      %p102 = scmp.ne.s32.totalorder %s85, %s101
      %p103 = scmp.eq.s32.totalorder %s28, 0
      %p104 = por %p102, %p103
      %s105 = ssub.s32 %s29, %s48
      %s106 = ssub.s32 %s31, %s40
      %s107 = sor.u32 %s105, %s106
      %p108 = scmp.eq.s32.totalorder %s107, 0
      %s110 = sadd.s32 %s109, 1
      %s111 = scalar_select %p108, %s109, %s110
      %p114 = pneg %p108
      %p115 = scmp.eq.s32.totalorder %s22, 1
      %p116 = por %p114, %p115
      %p117 = scmp.ne.s32.totalorder %s109, %s112
      %p118 = scmp.eq.s32.totalorder %s22, 0
      %p119 = por %p117, %p118
      %p120 = scmp.ne.s32.totalorder %s109, %s112
      %p121 = scmp.eq.s32.totalorder %s27, 1
      %p122 = por %p120, %p121
      %p123 = scmp.ne.s32.totalorder %s112, %s113
      %p124 = scmp.eq.s32.totalorder %s27, 0
      %p125 = por %p123, %p124
      %p126 = scmp.ne.s32.totalorder %s112, %s113
      %p127 = scmp.eq.s32.totalorder %s28, 1
      %p128 = por %p126, %p127
      %p130 = scmp.ne.s32.totalorder %s113, %s129
      %p131 = scmp.eq.s32.totalorder %s28, 0
      %p132 = por %p130, %p131
      %s133 = ssub.s32 %s29, %s48
      %s134 = ssub.s32 %s30, %s44
      %s135 = sor.u32 %s133, %s134
      %s136 = ssub.s32 %s31, %s40
      %s137 = sor.u32 %s135, %s136
      %p138 = scmp.eq.s32.totalorder %s137, 0
      %s140 = sadd.s32 %s139, 1
      %s141 = scalar_select %p138, %s139, %s140
      %p144 = pneg %p138
      %p145 = scmp.eq.s32.totalorder %s22, 1
      %p146 = por %p144, %p145
      %p147 = scmp.ne.s32.totalorder %s139, %s142
      %p148 = scmp.eq.s32.totalorder %s22, 0
      %p149 = por %p147, %p148
      %p150 = scmp.ne.s32.totalorder %s139, %s142
      %p151 = scmp.eq.s32.totalorder %s27, 1
      %p152 = por %p150, %p151
      %p153 = scmp.ne.s32.totalorder %s142, %s143
      %p154 = scmp.eq.s32.totalorder %s27, 0
      %p155 = por %p153, %p154
      %p156 = scmp.ne.s32.totalorder %s142, %s143
      %p157 = scmp.eq.s32.totalorder %s28, 1
      %p158 = por %p156, %p157
      %p160 = scmp.ne.s32.totalorder %s143, %s159
      %p161 = scmp.eq.s32.totalorder %s28, 0
      %p162 = por %p160, %p161
      %s163 = ssub.s32 %s29, %s48
      %s164 = ssub.s32 %s30, %s44
      %s165 = sor.u32 %s163, %s164
      %p166 = scmp.eq.s32.totalorder %s165, 0
      %s168 = sadd.s32 %s167, 1
      %s169 = scalar_select %p166, %s167, %s168
      %p172 = pneg %p166
      %p173 = scmp.eq.s32.totalorder %s22, 1
      %p174 = por %p172, %p173
      %p175 = scmp.ne.s32.totalorder %s167, %s170
      %p176 = scmp.eq.s32.totalorder %s22, 0
      %p177 = por %p175, %p176
      %p178 = scmp.ne.s32.totalorder %s167, %s170
      %p179 = scmp.eq.s32.totalorder %s27, 1
      %p180 = por %p178, %p179
      %p181 = scmp.ne.s32.totalorder %s170, %s171
      %p182 = scmp.eq.s32.totalorder %s27, 0
      %p183 = por %p181, %p182
      %p184 = scmp.ne.s32.totalorder %s170, %s171
      %p185 = scmp.eq.s32.totalorder %s28, 1
      %p186 = por %p184, %p185
      %p188 = scmp.ne.s32.totalorder %s171, %s187
      %p189 = scmp.eq.s32.totalorder %s28, 0
      %p190 = por %p188, %p189
      %p191 = scmp.le.s32.totalorder 1, %s22
      %p192 = scmp.lt.s32.totalorder %s22, 3
      %p193 = pnand %p191, %p192
      %p194 = pneg %p193
      // Predicated region
      $region9: #{tpu_custom_call.1} parent=5 // pred_check
        _
      $region10: #{tpu_custom_call.1} parent=5 // pred_check_branch
        %196 = sbr.rel (%p193) target = $region12
      $region11: #{tpu_custom_call.1} parent=5 // pred_region
        %s197 = ssub.s32 %s22, 1
      $region12: #{tpu_custom_call.1} parent=5 // pred_fallthru
        _
      %p198 = scmp.lt.s32.totalorder %s22, 2
      // Predicated region
      $region13: #{tpu_custom_call.1} parent=5 // pred_check
        %p199 = pneg %p198
      $region14: #{tpu_custom_call.1} parent=5 // pred_check_branch
        %201 = sbr.rel (%p199) target = $region16
      $region15: #{tpu_custom_call.1} parent=5 // pred_region
        // Predicated region
        $region17: #{tpu_custom_call.1} parent=15 // pred_check
          %p202 = pneg %p63
        $region18: #{tpu_custom_call.1} parent=15 // pred_check_branch
          %204 = sbr.rel (%p202) target = $region20
        $region19: #{tpu_custom_call.1} parent=15 // pred_region
          %s205 = sand.u32 %s53, 1
          %s206 = scalar_lea.sflag [#allocation6], %s205
          %s207 = sand.u32 %s53, 1
          %s208 = smul.addr %s207, 32
          %s209 = scalar_lea.vmem [#allocation5], %s208
          %s210 = smul.u32 4, %s29
          %212 = vsyncadd %s206, 0
          %s213 = sadd.s32 %s30, %s210
          %s214 = smul.addr %s213, 8
          %s215 = scalar_lea.hbm %s0, %s214
          %s216 = sshll.u32 %s215, 4
          %s217 = int_to_ptr.hbm [resolvable:$true] %s216
          %s218 = sshll.u32 %s209, 4
          %s219 = int_to_ptr.vmem [resolvable:$true] %s218
          %224 = dma.hbm_to_vmem [thread:$0]  %s217, 512, %s219, %s206, 128, 128, 8
        $region20: #{tpu_custom_call.1} parent=15 // pred_fallthru
          _
        // Predicated region
        $region21: #{tpu_custom_call.1} parent=15 // pred_check
          %p225 = pneg %p91
        $region22: #{tpu_custom_call.1} parent=15 // pred_check_branch
          %227 = sbr.rel (%p225) target = $region24
        $region23: #{tpu_custom_call.1} parent=15 // pred_region
          %s228 = sand.u32 %s22, 1
          %s229 = scalar_lea.sflag [#allocation9], %s228
          %s230 = sand.u32 %s81, 1
          %s231 = smul.addr %s230, 32
          %s232 = scalar_lea.vmem [#allocation8], %s231
          %s233 = smul.u32 4, %s29
          %235 = vsyncadd %s229, 0
          %s236 = sadd.s32 %s31, %s233
          %s237 = smul.addr %s236, 8
          %s238 = scalar_lea.hbm %s1, %s237
          %s239 = sshll.u32 %s238, 4
          %s240 = int_to_ptr.hbm [resolvable:$true] %s239
          %s241 = sshll.u32 %s232, 4
          %s242 = int_to_ptr.vmem [resolvable:$true] %s241
          %247 = dma.hbm_to_vmem [thread:$0]  %s240, 512, %s242, %s229, 128, 128, 8
        $region24: #{tpu_custom_call.1} parent=15 // pred_fallthru
          _
        // Predicated region
        $region25: #{tpu_custom_call.1} parent=15 // pred_check
          %p248 = pneg %p119
        $region26: #{tpu_custom_call.1} parent=15 // pred_check_branch
          %250 = sbr.rel (%p248) target = $region28
        $region27: #{tpu_custom_call.1} parent=15 // pred_region
          %s251 = sand.u32 %s22, 1
          %s252 = scalar_lea.sflag [#allocation9], %s251
          %s253 = sand.u32 %s109, 1
          %s254 = smul.addr %s253, 32
          %s255 = scalar_lea.vmem [#allocation10], %s254
          %s256 = smul.u32 4, %s29
          %258 = vsyncadd %s252, 0
          %s259 = sadd.s32 %s31, %s256
          %s260 = smul.addr %s259, 8
          %s261 = scalar_lea.hbm %s2, %s260
          %s262 = sshll.u32 %s261, 4
          %s263 = int_to_ptr.hbm [resolvable:$true] %s262
          %s264 = sshll.u32 %s255, 4
          %s265 = int_to_ptr.vmem [resolvable:$true] %s264
          %270 = dma.hbm_to_vmem [thread:$0]  %s263, 512, %s265, %s252, 128, 128, 8
        $region28: #{tpu_custom_call.1} parent=15 // pred_fallthru
          _
        // Predicated region
        $region29: #{tpu_custom_call.1} parent=15 // pred_check
          %p271 = pneg %p149
        $region30: #{tpu_custom_call.1} parent=15 // pred_check_branch
          %273 = sbr.rel (%p271) target = $region32
        $region31: #{tpu_custom_call.1} parent=15 // pred_region
          %s274 = sand.u32 %s139, 1
          %s275 = scalar_lea.sflag [#allocation12], %s274
          %s276 = sand.u32 %s139, 1
          %s277 = smul.addr %s276, 8
          %s278 = scalar_lea.vmem [#allocation11], %s277
          %s279 = smul.u32 4, %s29
          %281 = vsyncadd %s275, 0
          %s282 = sadd.s32 %s31, %s30
          %s283 = sadd.s32 %s282, %s279
          %s284 = smul.addr %s283, 2
          %s285 = scalar_lea.hbm %s3, %s284
          %s286 = sshll.u32 %s285, 4
          %s287 = int_to_ptr.hbm [resolvable:$true] %s286
          %s288 = sshll.u32 %s278, 4
          %s289 = int_to_ptr.vmem [resolvable:$true] %s288
          %294 = dma.hbm_to_vmem [thread:$0]  %s287, 128, %s289, %s275, 32, 32, 2
        $region32: #{tpu_custom_call.1} parent=15 // pred_fallthru
          _
      $region16: #{tpu_custom_call.1} parent=5 // pred_fallthru
        _
      %p295 = scmp.le.s32.totalorder 1, %s22
      %p296 = scmp.lt.s32.totalorder %s22, 3
      %p297 = pnand %p295, %p296
      %p298 = pneg %p297
      // Predicated region
      $region33: #{tpu_custom_call.1} parent=5 // pred_check
        _
      $region34: #{tpu_custom_call.1} parent=5 // pred_check_branch
        %300 = sbr.rel (%p297) target = $region36
      $region35: #{tpu_custom_call.1} parent=5 // pred_region
        %s301 = ssub.s32 %s22, 1
        %s302 = sand.u32 %s56, 1
        %s303 = scalar_lea.sflag [#allocation6], %s302
        %s304 = sand.u32 %s56, 1
        %s305 = smul.addr %s304, 32
        %s306 = scalar_lea.vmem [#allocation5], %s305
        // Predicated region
        $region37: #{tpu_custom_call.1} parent=35 // pred_check
          %p307 = pneg %p69
        $region38: #{tpu_custom_call.1} parent=35 // pred_check_branch
          %309 = sbr.rel (%p307) target = $region40
        $region39: #{tpu_custom_call.1} parent=35 // pred_region
          %311 = dma.done %s303, 512
        $region40: #{tpu_custom_call.1} parent=35 // pred_fallthru
          _
        %s312 = sand.u32 %s27, 1
        %s313 = scalar_lea.sflag [#allocation9], %s312
        %s314 = sand.u32 %s84, 1
        %s315 = smul.addr %s314, 32
        %s316 = scalar_lea.vmem [#allocation8], %s315
        // Predicated region
        $region41: #{tpu_custom_call.1} parent=35 // pred_check
          %p317 = pneg %p97
        $region42: #{tpu_custom_call.1} parent=35 // pred_check_branch
          %319 = sbr.rel (%p317) target = $region44
        $region43: #{tpu_custom_call.1} parent=35 // pred_region
          %321 = dma.done %s313, 512
        $region44: #{tpu_custom_call.1} parent=35 // pred_fallthru
          _
        %s322 = sand.u32 %s27, 1
        %s323 = scalar_lea.sflag [#allocation9], %s322
        %s324 = sand.u32 %s112, 1
        %s325 = smul.addr %s324, 32
        %s326 = scalar_lea.vmem [#allocation10], %s325
        // Predicated region
        $region45: #{tpu_custom_call.1} parent=35 // pred_check
          %p327 = pneg %p125
        $region46: #{tpu_custom_call.1} parent=35 // pred_check_branch
          %329 = sbr.rel (%p327) target = $region48
        $region47: #{tpu_custom_call.1} parent=35 // pred_region
          %331 = dma.done %s323, 512
        $region48: #{tpu_custom_call.1} parent=35 // pred_fallthru
          _
        %s332 = sand.u32 %s142, 1
        %s333 = scalar_lea.sflag [#allocation12], %s332
        %s334 = sand.u32 %s142, 1
        %s335 = smul.addr %s334, 8
        %s336 = scalar_lea.vmem [#allocation11], %s335
        // Predicated region
        $region49: #{tpu_custom_call.1} parent=35 // pred_check
          %p337 = pneg %p155
        $region50: #{tpu_custom_call.1} parent=35 // pred_check_branch
          %339 = sbr.rel (%p337) target = $region52
        $region51: #{tpu_custom_call.1} parent=35 // pred_region
          %341 = dma.done %s333, 128
        $region52: #{tpu_custom_call.1} parent=35 // pred_fallthru
          _
        %s342 = sand.u32 %s56, 1
        %s343 = scalar_lea.sflag [#allocation6], %s342
        %s344 = sand.u32 %s56, 1
        %s345 = smul.addr %s344, 32
        %s346 = scalar_lea.vmem [#allocation5], %s345
        %p347 = pneg %p69
        %p348 = pneg %p66
        %s349 = sand.u32 %s27, 1
        %s350 = scalar_lea.sflag [#allocation9], %s349
        %s351 = sand.u32 %s84, 1
        %s352 = smul.addr %s351, 32
        %s353 = scalar_lea.vmem [#allocation8], %s352
        %p354 = pneg %p97
        %p355 = pneg %p94
        %s356 = sand.u32 %s27, 1
        %s357 = scalar_lea.sflag [#allocation9], %s356
        %s358 = sand.u32 %s112, 1
        %s359 = smul.addr %s358, 32
        %s360 = scalar_lea.vmem [#allocation10], %s359
        %p361 = pneg %p125
        %p362 = pneg %p122
        %s363 = sand.u32 %s142, 1
        %s364 = scalar_lea.sflag [#allocation12], %s363
        %s365 = sand.u32 %s142, 1
        %s366 = smul.addr %s365, 8
        %s367 = scalar_lea.vmem [#allocation11], %s366
        %p368 = pneg %p155
        %p369 = pneg %p152
        %p370 = pneg %p183
        %p371 = pneg %p180
        %s372 = sand.u32 %s170, 1
        %s373 = scalar_lea.sflag [#allocation7], %s372
        %s374 = sand.u32 %s170, 1
        %s375 = smul.addr %s374, 32
        %s376 = scalar_lea.vmem [#allocation13], %s375
        %s377 = smul.u32 4, %s32
        %s378 = smul.u32 4, %s32
        %s379 = smul.u32 4, %s32
        %s380 = smul.u32 4, %s32
        %s381 = smul.u32 4, %s32
        %p384 = scmp.eq.s32.totalorder %s34, 0
        // Predicated region
        $region53: #{tpu_custom_call.1} parent=35 // pred_check
          %p385 = pneg %p384
        $region54: #{tpu_custom_call.1} parent=35 // pred_check_branch
          %387 = sbr.rel (%p385) target = $region56
        $region55: #{tpu_custom_call.1} parent=35 // pred_region
          %vm388 = vcmask 7168
          %389 = vst.msk [vmem:[#allocation2] sm:$0xff] %vm388, -inf
          %390 = vst.msk [vmem:[#allocation2 + $0x8] sm:$0xff] %vm388, -inf
          %391 = vst.msk [vmem:[#allocation2 + $0x10] sm:$0xff] %vm388, -inf
          %392 = vst.msk [vmem:[#allocation2 + $0x18] sm:$0xff] %vm388, -inf
          %393 = vst.msk [vmem:[#allocation3] sm:$0xff] %vm388, 0.0
          %394 = vst.msk [vmem:[#allocation3 + $0x8] sm:$0xff] %vm388, 0.0
          %395 = vst.msk [vmem:[#allocation3 + $0x10] sm:$0xff] %vm388, 0.0
          %396 = vst.msk [vmem:[#allocation3 + $0x18] sm:$0xff] %vm388, 0.0
          %vm397 = vcmask 523264
          %398 = vst.msk [vmem:[#allocation4] sm:$0xff] %vm397, 0.0
          %399 = vst.msk [vmem:[#allocation4 + $0x8] sm:$0xff] %vm397, 0.0
          %400 = vst.msk [vmem:[#allocation4 + $0x10] sm:$0xff] %vm397, 0.0
          %401 = vst.msk [vmem:[#allocation4 + $0x18] sm:$0xff] %vm397, 0.0
        $region56: #{tpu_custom_call.1} parent=35 // pred_fallthru
          _
        %v402 = vld [vmem:[%s306] sm:$0xff]
        %v403 = vld [vmem:[%s306 + $0x8] sm:$0xff]
        %v404 = vld [vmem:[%s306 + $0x10] sm:$0xff]
        %v405 = vld [vmem:[%s306 + $0x18] sm:$0xff]
        %v406 = vmul.f32 %v402, 0.125
        %v407 = vmul.f32 %v403, 0.125
        %v408 = vmul.f32 %v404, 0.125
        %v409 = vmul.f32 %v405, 0.125
        %v410 = vld [vmem:[%s316] sm:$0xff]
        %v411 = vld [vmem:[%s316 + $0x8] sm:$0xff]
        %v412 = vld [vmem:[%s316 + $0x10] sm:$0xff]
        %v413 = vld [vmem:[%s316 + $0x18] sm:$0xff]
        %vm414 = vcmask 523264
        %v416 = vsel %vm414, %v406, 0
        %v419 = vsel %vm414, %v410, 0
        %421 = vmatpush.xpose.msra.mxu0 0.0
        %422 = vmatpush.xpose.msra.mxu0 0.0
        %423 = vmatpush.xpose.msra.mxu0 0.0
        %424 = vmatpush.xpose.msra.mxu0 0.0
        %425 = vmatpush.xpose.msra.mxu0 0.0
        %426 = vmatpush.xpose.msra.mxu0 0.0
        %427 = vmatpush.xpose.msra.mxu0 0.0
        %428 = vmatpush.xpose.msra.mxu0 0.0
        %429 = vmatpush.xpose.msra.mxu0 0.0
        %430 = vmatpush.xpose.msra.mxu0 0.0
        %431 = vmatpush.xpose.msra.mxu0 0.0
        %432 = vmatpush.xpose.msra.mxu0 0.0
        %433 = vmatpush.xpose.msra.mxu0 0.0
        %434 = vmatpush.xpose.msra.mxu0 0.0
        %435 = vmatpush.xpose.msra.mxu0 0.0
        %436 = vmatpush.xpose.msra.mxu0 %v419
        %437 = vmatmul.f32.gmra.mxu0 %v416
        %v438 = vpop.f32.mrf.mxu0
        %v439 = vadd.f32 0.0, %v438
        %440 = vdwg.mxu0
        %v442 = vsel %vm414, %v407, 0
        %v445 = vsel %vm414, %v411, 0
        %447 = vmatpush.xpose.msra.mxu0 0.0
        %448 = vmatpush.xpose.msra.mxu0 0.0
        %449 = vmatpush.xpose.msra.mxu0 0.0
        %450 = vmatpush.xpose.msra.mxu0 0.0
        %451 = vmatpush.xpose.msra.mxu0 0.0
        %452 = vmatpush.xpose.msra.mxu0 0.0
        %453 = vmatpush.xpose.msra.mxu0 0.0
        %454 = vmatpush.xpose.msra.mxu0 0.0
        %455 = vmatpush.xpose.msra.mxu0 0.0
        %456 = vmatpush.xpose.msra.mxu0 0.0
        %457 = vmatpush.xpose.msra.mxu0 0.0
        %458 = vmatpush.xpose.msra.mxu0 0.0
        %459 = vmatpush.xpose.msra.mxu0 0.0
        %460 = vmatpush.xpose.msra.mxu0 0.0
        %461 = vmatpush.xpose.msra.mxu0 0.0
        %462 = vmatpush.xpose.msra.mxu0 %v445
        %463 = vmatmul.f32.gmra.mxu0 %v442
        %v464 = vpop.f32.mrf.mxu0
        %v465 = vadd.f32 0.0, %v464
        %466 = vdwg.mxu0
        %v468 = vsel %vm414, %v408, 0
        %v471 = vsel %vm414, %v412, 0
        %473 = vmatpush.xpose.msra.mxu0 0.0
        %474 = vmatpush.xpose.msra.mxu0 0.0
        %475 = vmatpush.xpose.msra.mxu0 0.0
        %476 = vmatpush.xpose.msra.mxu0 0.0
        %477 = vmatpush.xpose.msra.mxu0 0.0
        %478 = vmatpush.xpose.msra.mxu0 0.0
        %479 = vmatpush.xpose.msra.mxu0 0.0
        %480 = vmatpush.xpose.msra.mxu0 0.0
        %481 = vmatpush.xpose.msra.mxu0 0.0
        %482 = vmatpush.xpose.msra.mxu0 0.0
        %483 = vmatpush.xpose.msra.mxu0 0.0
        %484 = vmatpush.xpose.msra.mxu0 0.0
        %485 = vmatpush.xpose.msra.mxu0 0.0
        %486 = vmatpush.xpose.msra.mxu0 0.0
        %487 = vmatpush.xpose.msra.mxu0 0.0
        %488 = vmatpush.xpose.msra.mxu0 %v471
        %489 = vmatmul.f32.gmra.mxu0 %v468
        %v490 = vpop.f32.mrf.mxu0
        %v491 = vadd.f32 0.0, %v490
        %492 = vdwg.mxu0
        %v494 = vsel %vm414, %v409, 0
        %v497 = vsel %vm414, %v413, 0
        %499 = vmatpush.xpose.msra.mxu0 0.0
        %500 = vmatpush.xpose.msra.mxu0 0.0
        %501 = vmatpush.xpose.msra.mxu0 0.0
        %502 = vmatpush.xpose.msra.mxu0 0.0
        %503 = vmatpush.xpose.msra.mxu0 0.0
        %504 = vmatpush.xpose.msra.mxu0 0.0
        %505 = vmatpush.xpose.msra.mxu0 0.0
        %506 = vmatpush.xpose.msra.mxu0 0.0
        %507 = vmatpush.xpose.msra.mxu0 0.0
        %508 = vmatpush.xpose.msra.mxu0 0.0
        %509 = vmatpush.xpose.msra.mxu0 0.0
        %510 = vmatpush.xpose.msra.mxu0 0.0
        %511 = vmatpush.xpose.msra.mxu0 0.0
        %512 = vmatpush.xpose.msra.mxu0 0.0
        %513 = vmatpush.xpose.msra.mxu0 0.0
        %514 = vmatpush.xpose.msra.mxu0 %v497
        %515 = vmatmul.f32.gmra.mxu0 %v494
        %v516 = vpop.f32.mrf.mxu0
        %v517 = vadd.f32 0.0, %v516
        %518 = vdwg.mxu0
        %v519 = vld [vmem:[%s336] sm:$0x3]
        %v520 = vld [vmem:[%s336 + $0x2] sm:$0x3]
        %v521 = vld [vmem:[%s336 + $0x4] sm:$0x3]
        %v522 = vld [vmem:[%s336 + $0x6] sm:$0x3]
        %vm523 = vnez %v519
        %vm524 = vnez %v520
        %vm525 = vnez %v521
        %vm526 = vnez %v522
        %v527 = vsel %vm523, 16843009, 0
        %v528 = vsel %vm524, 16843009, 0
        %v529 = vsel %vm525, 16843009, 0
        %v530 = vsel %vm526, 16843009, 0
        %v531 = vunpack.c.0.s8 %v527
        %v532 = vunpack.c.0.s8 %v528
        %v533 = vunpack.c.0.s8 %v529
        %v534 = vunpack.c.0.s8 %v530
        %vm535 = vcmp.ne.s32.totalorder %v531, 0
        %vm536 = vcmp.ne.s32.totalorder %v532, 0
        %vm537 = vcmp.ne.s32.totalorder %v533, 0
        %vm538 = vcmp.ne.s32.totalorder %v534, 0
        %v539 = vsel %vm535, -1e+09, %v439
        %v540 = vsel %vm536, -1e+09, %v465
        %v541 = vsel %vm537, -1e+09, %v491
        %v542 = vsel %vm538, -1e+09, %v517
        %v543 = vld [vmem:[#allocation2] sm:$0xff]
        %v544 = vld [vmem:[#allocation2 + $0x8] sm:$0xff]
        %v545 = vld [vmem:[#allocation2 + $0x10] sm:$0xff]
        %v546 = vld [vmem:[#allocation2 + $0x18] sm:$0xff]
        %vm547 = vcmask 64512
        %v548 = vsel %vm547, %v539, -inf
        %549 = vmax.xlane.f32.xlu0 %v548
        %v550 = vpop.xlane.xlu0 %549
        %v551 = vsel %vm547, %v540, -inf
        %552 = vmax.xlane.f32.xlu0 %v551
        %v553 = vpop.xlane.xlu0 %552
        %v554 = vsel %vm547, %v541, -inf
        %555 = vmax.xlane.f32.xlu0 %v554
        %v556 = vpop.xlane.xlu0 %555
        %v557 = vsel %vm547, %v542, -inf
        %558 = vmax.xlane.f32.xlu0 %v557
        %v559 = vpop.xlane.xlu0 %558
        %v560 = vmax.f32 %v543, %v550
        %v561 = vmax.f32 %v544, %v553
        %v562 = vmax.f32 %v545, %v556
        %v563 = vmax.f32 %v546, %v559
        %v564 = vsub.f32 %v543, %v560
        %v565 = vsub.f32 %v544, %v561
        %v566 = vsub.f32 %v545, %v562
        %v567 = vsub.f32 %v546, %v563
        %v568 = vmul.f32 %v564, 1.442695
        %v569 = vpow.pop %v568
        %v570 = vmul.f32 %v565, 1.442695
        %v571 = vpow.pop %v570
        %v572 = vmul.f32 %v566, 1.442695
        %v573 = vpow.pop %v572
        %v574 = vmul.f32 %v567, 1.442695
        %v575 = vpow.pop %v574
        %577 = vset.pattern.permute.xlu0 0
        %578 = vperm.xlu0 %577, %v560
        %v579 = vpop.permute.xlu0 %578
        %582 = vset.pattern.permute.xlu0 0
        %583 = vperm.xlu0 %582, %v561
        %v584 = vpop.permute.xlu0 %583
        %587 = vset.pattern.permute.xlu0 0
        %588 = vperm.xlu0 %587, %v562
        %v589 = vpop.permute.xlu0 %588
        %592 = vset.pattern.permute.xlu0 0
        %593 = vperm.xlu0 %592, %v563
        %v594 = vpop.permute.xlu0 %593
        %v596 = vsub.f32 %v539, %v579
        %v597 = vsub.f32 %v540, %v584
        %v598 = vsub.f32 %v541, %v589
        %v599 = vsub.f32 %v542, %v594
        %v600 = vmul.f32 %v596, 1.442695
        %v601 = vpow.pop %v600
        %v602 = vmul.f32 %v597, 1.442695
        %v603 = vpow.pop %v602
        %v604 = vmul.f32 %v598, 1.442695
        %v605 = vpow.pop %v604
        %v606 = vmul.f32 %v599, 1.442695
        %v607 = vpow.pop %v606
        %v608 = vld [vmem:[#allocation3] sm:$0xff]
        %v609 = vld [vmem:[#allocation3 + $0x8] sm:$0xff]
        %v610 = vld [vmem:[#allocation3 + $0x10] sm:$0xff]
        %v611 = vld [vmem:[#allocation3 + $0x18] sm:$0xff]
        %v612 = vmul.f32 %v569, %v608
        %v613 = vmul.f32 %v571, %v609
        %v614 = vmul.f32 %v573, %v610
        %v615 = vmul.f32 %v575, %v611
        %v616 = vsel %vm547, %v601, 0.0
        %617 = vadd.xlane.f32.xlu0 %v616
        %v618 = vpop.xlane.xlu0 %617
        %v619 = vsel %vm547, %v603, 0.0
        %620 = vadd.xlane.f32.xlu0 %v619
        %v621 = vpop.xlane.xlu0 %620
        %v622 = vsel %vm547, %v605, 0.0
        %623 = vadd.xlane.f32.xlu0 %v622
        %v624 = vpop.xlane.xlu0 %623
        %v625 = vsel %vm547, %v607, 0.0
        %626 = vadd.xlane.f32.xlu0 %v625
        %v627 = vpop.xlane.xlu0 %626
        %v628 = vadd.f32 %v612, %v618
        %v629 = vadd.f32 %v613, %v621
        %v630 = vadd.f32 %v614, %v624
        %v631 = vadd.f32 %v615, %v627
        %vm632 = vcmask 7168
        %633 = vst.msk [vmem:[#allocation3] sm:$0xff] %vm632, %v628
        %634 = vst.msk [vmem:[#allocation3 + $0x8] sm:$0xff] %vm632, %v629
        %635 = vst.msk [vmem:[#allocation3 + $0x10] sm:$0xff] %vm632, %v630
        %636 = vst.msk [vmem:[#allocation3 + $0x18] sm:$0xff] %vm632, %v631
        %v637 = vld [vmem:[%s326] sm:$0xff]
        %v638 = vld [vmem:[%s326 + $0x8] sm:$0xff]
        %v639 = vld [vmem:[%s326 + $0x10] sm:$0xff]
        %v640 = vld [vmem:[%s326 + $0x18] sm:$0xff]
        %v641 = vld [vmem:[#allocation4] sm:$0xff]
        %v642 = vld [vmem:[#allocation4 + $0x8] sm:$0xff]
        %v643 = vld [vmem:[#allocation4 + $0x10] sm:$0xff]
        %v644 = vld [vmem:[#allocation4 + $0x18] sm:$0xff]
        %646 = vset.pattern.permute.xlu0 0
        %647 = vperm.xlu0 %646, %v569
        %v648 = vpop.permute.xlu0 %647
        %651 = vset.pattern.permute.xlu0 0
        %652 = vperm.xlu0 %651, %v571
        %v653 = vpop.permute.xlu0 %652
        %656 = vset.pattern.permute.xlu0 0
        %657 = vperm.xlu0 %656, %v573
        %v658 = vpop.permute.xlu0 %657
        %661 = vset.pattern.permute.xlu0 0
        %662 = vperm.xlu0 %661, %v575
        %v663 = vpop.permute.xlu0 %662
        %v665 = vmul.f32 %v648, %v641
        %v666 = vmul.f32 %v653, %v642
        %v667 = vmul.f32 %v658, %v643
        %v668 = vmul.f32 %v663, %v644
        %v670 = vsel %vm547, %v601, 0
        %672 = vmatpush.msra.mxu0 0.0
        %673 = vmatpush.msra.mxu0 0.0
        %674 = vmatpush.msra.mxu0 0.0
        %675 = vmatpush.msra.mxu0 0.0
        %676 = vmatpush.msra.mxu0 0.0
        %677 = vmatpush.msra.mxu0 0.0
        %678 = vmatpush.msra.mxu0 0.0
        %679 = vmatpush.msra.mxu0 0.0
        %680 = vmatpush.msra.mxu0 0.0
        %681 = vmatpush.msra.mxu0 0.0
        %682 = vmatpush.msra.mxu0 0.0
        %683 = vmatpush.msra.mxu0 0.0
        %684 = vmatpush.msra.mxu0 0.0
        %685 = vmatpush.msra.mxu0 0.0
        %686 = vmatpush.msra.mxu0 0.0
        %687 = vmatpush.msra.mxu0 %v637
        %688 = vmatmul.f32.gmra.mxu0 %v670
        %v689 = vpop.f32.mrf.mxu0
        %v690 = vadd.f32 0.0, %v689
        %691 = vdwg.mxu0
        %v693 = vsel %vm547, %v603, 0
        %695 = vmatpush.msra.mxu0 0.0
        %696 = vmatpush.msra.mxu0 0.0
        %697 = vmatpush.msra.mxu0 0.0
        %698 = vmatpush.msra.mxu0 0.0
        %699 = vmatpush.msra.mxu0 0.0
        %700 = vmatpush.msra.mxu0 0.0
        %701 = vmatpush.msra.mxu0 0.0
        %702 = vmatpush.msra.mxu0 0.0
        %703 = vmatpush.msra.mxu0 0.0
        %704 = vmatpush.msra.mxu0 0.0
        %705 = vmatpush.msra.mxu0 0.0
        %706 = vmatpush.msra.mxu0 0.0
        %707 = vmatpush.msra.mxu0 0.0
        %708 = vmatpush.msra.mxu0 0.0
        %709 = vmatpush.msra.mxu0 0.0
        %710 = vmatpush.msra.mxu0 %v638
        %711 = vmatmul.f32.gmra.mxu0 %v693
        %v712 = vpop.f32.mrf.mxu0
        %v713 = vadd.f32 0.0, %v712
        %714 = vdwg.mxu0
        %v716 = vsel %vm547, %v605, 0
        %718 = vmatpush.msra.mxu0 0.0
        %719 = vmatpush.msra.mxu0 0.0
        %720 = vmatpush.msra.mxu0 0.0
        %721 = vmatpush.msra.mxu0 0.0
        %722 = vmatpush.msra.mxu0 0.0
        %723 = vmatpush.msra.mxu0 0.0
        %724 = vmatpush.msra.mxu0 0.0
        %725 = vmatpush.msra.mxu0 0.0
        %726 = vmatpush.msra.mxu0 0.0
        %727 = vmatpush.msra.mxu0 0.0
        %728 = vmatpush.msra.mxu0 0.0
        %729 = vmatpush.msra.mxu0 0.0
        %730 = vmatpush.msra.mxu0 0.0
        %731 = vmatpush.msra.mxu0 0.0
        %732 = vmatpush.msra.mxu0 0.0
        %733 = vmatpush.msra.mxu0 %v639
        %734 = vmatmul.f32.gmra.mxu0 %v716
        %v735 = vpop.f32.mrf.mxu0
        %v736 = vadd.f32 0.0, %v735
        %737 = vdwg.mxu0
        %v739 = vsel %vm547, %v607, 0
        %741 = vmatpush.msra.mxu0 0.0
        %742 = vmatpush.msra.mxu0 0.0
        %743 = vmatpush.msra.mxu0 0.0
        %744 = vmatpush.msra.mxu0 0.0
        %745 = vmatpush.msra.mxu0 0.0
        %746 = vmatpush.msra.mxu0 0.0
        %747 = vmatpush.msra.mxu0 0.0
        %748 = vmatpush.msra.mxu0 0.0
        %749 = vmatpush.msra.mxu0 0.0
        %750 = vmatpush.msra.mxu0 0.0
        %751 = vmatpush.msra.mxu0 0.0
        %752 = vmatpush.msra.mxu0 0.0
        %753 = vmatpush.msra.mxu0 0.0
        %754 = vmatpush.msra.mxu0 0.0
        %755 = vmatpush.msra.mxu0 0.0
        %756 = vmatpush.msra.mxu0 %v640
        %757 = vmatmul.f32.gmra.mxu0 %v739
        %v758 = vpop.f32.mrf.mxu0
        %v759 = vadd.f32 0.0, %v758
        %760 = vdwg.mxu0
        %v761 = vadd.f32 %v665, %v690
        %v762 = vadd.f32 %v666, %v713
        %v763 = vadd.f32 %v667, %v736
        %v764 = vadd.f32 %v668, %v759
        %765 = vst.msk [vmem:[#allocation4] sm:$0xff] %vm414, %v761
        %766 = vst.msk [vmem:[#allocation4 + $0x8] sm:$0xff] %vm414, %v762
        %767 = vst.msk [vmem:[#allocation4 + $0x10] sm:$0xff] %vm414, %v763
        %768 = vst.msk [vmem:[#allocation4 + $0x18] sm:$0xff] %vm414, %v764
        %769 = vst.msk [vmem:[#allocation2] sm:$0xff] %vm632, %v560
        %770 = vst.msk [vmem:[#allocation2 + $0x8] sm:$0xff] %vm632, %v561
        %771 = vst.msk [vmem:[#allocation2 + $0x10] sm:$0xff] %vm632, %v562
        %772 = vst.msk [vmem:[#allocation2 + $0x18] sm:$0xff] %vm632, %v563
        // Predicated region
        $region57: #{tpu_custom_call.1} parent=35 // pred_check
          %p773 = pneg %p384
        $region58: #{tpu_custom_call.1} parent=35 // pred_check_branch
          %775 = sbr.rel (%p773) target = $region60
        $region59: #{tpu_custom_call.1} parent=35 // pred_region
          %v776 = vld [vmem:[#allocation3] sm:$0xff]
          %v777 = vld [vmem:[#allocation3 + $0x8] sm:$0xff]
          %v778 = vld [vmem:[#allocation3 + $0x10] sm:$0xff]
          %v779 = vld [vmem:[#allocation3 + $0x18] sm:$0xff]
          %v780 = vrcp.pop %v776
          %v781 = vrcp.pop %v777
          %v782 = vrcp.pop %v778
          %v783 = vrcp.pop %v779
          %v784 = vmul.f32 %v776, %v780
          %v785 = vmul.f32 %v777, %v781
          %v786 = vmul.f32 %v778, %v782
          %v787 = vmul.f32 %v779, %v783
          %v788 = vsub.f32 2.0, %v784
          %v789 = vsub.f32 2.0, %v785
          %v790 = vsub.f32 2.0, %v786
          %v791 = vsub.f32 2.0, %v787
          %v792 = vmul.f32 %v780, %v788
          %v793 = vmul.f32 %v781, %v789
          %v794 = vmul.f32 %v782, %v790
          %v795 = vmul.f32 %v783, %v791
          %v796 = vld [vmem:[#allocation4] sm:$0xff]
          %v797 = vld [vmem:[#allocation4 + $0x8] sm:$0xff]
          %v798 = vld [vmem:[#allocation4 + $0x10] sm:$0xff]
          %v799 = vld [vmem:[#allocation4 + $0x18] sm:$0xff]
          %801 = vset.pattern.permute.xlu0 0
          %802 = vperm.xlu0 %801, %v792
          %v803 = vpop.permute.xlu0 %802
          %806 = vset.pattern.permute.xlu0 0
          %807 = vperm.xlu0 %806, %v793
          %v808 = vpop.permute.xlu0 %807
          %811 = vset.pattern.permute.xlu0 0
          %812 = vperm.xlu0 %811, %v794
          %v813 = vpop.permute.xlu0 %812
          %816 = vset.pattern.permute.xlu0 0
          %817 = vperm.xlu0 %816, %v795
          %v818 = vpop.permute.xlu0 %817
          %v820 = vmul.f32 %v796, %v803
          %v821 = vmul.f32 %v797, %v808
          %v822 = vmul.f32 %v798, %v813
          %v823 = vmul.f32 %v799, %v818
          %824 = vst.msk [vmem:[%s376] sm:$0xff] %vm414, %v820
          %825 = vst.msk [vmem:[%s376 + $0x8] sm:$0xff] %vm414, %v821
          %826 = vst.msk [vmem:[%s376 + $0x10] sm:$0xff] %vm414, %v822
          %827 = vst.msk [vmem:[%s376 + $0x18] sm:$0xff] %vm414, %v823
        $region60: #{tpu_custom_call.1} parent=35 // pred_fallthru
          _
        %s828 = sand.u32 %s170, 1
        %s829 = scalar_lea.sflag [#allocation7], %s828
        %s830 = sand.u32 %s170, 1
        %s831 = smul.addr %s830, 32
        %s832 = scalar_lea.vmem [#allocation13], %s831
        // Predicated region
        $region61: #{tpu_custom_call.1} parent=35 // pred_check
          %p833 = pneg %p180
        $region62: #{tpu_custom_call.1} parent=35 // pred_check_branch
          %835 = sbr.rel (%p833) target = $region64
        $region63: #{tpu_custom_call.1} parent=35 // pred_region
          %s836 = smul.u32 4, %s32
          %838 = vsyncadd %s829, 0
          %s839 = sadd.s32 %s33, %s836
          %s840 = smul.addr %s839, 8
          %s841 = scalar_lea.hbm %s4, %s840
          %s842 = sshll.u32 %s832, 4
          %s843 = int_to_ptr.vmem [resolvable:$true] %s842
          %s844 = sshll.u32 %s841, 4
          %s845 = int_to_ptr.hbm [resolvable:$true] %s844
          %850 = dma.vmem_to_hbm [thread:$0]  %s843, 512, %s845, %s829, 128, 128, 8
        $region64: #{tpu_custom_call.1} parent=35 // pred_fallthru
          _
      $region36: #{tpu_custom_call.1} parent=5 // pred_fallthru
        _
      %p851 = scmp.le.s32.totalorder 2, %s22
      // Predicated region
      $region65: #{tpu_custom_call.1} parent=5 // pred_check
        %p852 = pneg %p851
      $region66: #{tpu_custom_call.1} parent=5 // pred_check_branch
        %854 = sbr.rel (%p852) target = $region68
      $region67: #{tpu_custom_call.1} parent=5 // pred_region
        %s855 = ssub.s32 %s22, 2
        // Predicated region
        $region69: #{tpu_custom_call.1} parent=67 // pred_check
          %p856 = pneg %p186
        $region70: #{tpu_custom_call.1} parent=67 // pred_check_branch
          %858 = sbr.rel (%p856) target = $region72
        $region71: #{tpu_custom_call.1} parent=67 // pred_region
          %s859 = sand.u32 %s171, 1
          %s860 = scalar_lea.sflag [#allocation7], %s859
          %s861 = sand.u32 %s171, 1
          %s862 = smul.addr %s861, 32
          %s863 = scalar_lea.vmem [#allocation13], %s862
          %865 = dma.done %s860, 512
        $region72: #{tpu_custom_call.1} parent=67 // pred_fallthru
          _
      $region68: #{tpu_custom_call.1} parent=5 // pred_fallthru
        _
    $region6: #{tpu_custom_call.1} parent=1 // loop_footer
      %s26 = sadd.s32 1, %s22
    $region7: #{tpu_custom_call.1} parent=1 // loop_footer_branch
      %21 = sbr.rel target = $region3
    $region8: #{tpu_custom_call.1} parent=1 // loop_exit
      _
    %866 = vsyncpa [#allocation6], 1
    %s867 = scalar_lea.sflag [#allocation6], 1
    %868 = vsyncpa %s867, 1
    %869 = vsyncpa [#allocation9], 1
    %s870 = scalar_lea.sflag [#allocation9], 1
    %871 = vsyncpa %s870, 1
    %872 = vsyncpa [#allocation12], 1
    %s873 = scalar_lea.sflag [#allocation12], 1
    %874 = vsyncpa %s873, 1
    %875 = vsyncpa [#allocation7], 1
    %s876 = scalar_lea.sflag [#allocation7], 1
    %877 = vsyncpa %s876, 1

</llo_original>
